<compile_context>
chip_gen: v6e
topology: v6e:2x2x1
jax: 0.10.0
libtpu: 0.0.40
codegen_flags: <defaults>
</compile_context>

<pallas_src>
import functools

import jax
import jax.numpy as jnp
from jax.experimental import pallas as pl
from jax.experimental.pallas import tpu as pltpu

_BN_EPS = 1e-5
_LANE = 128
_ROW_ALIGN = 16                    # bf16 slab -> native (16, 128) tiling
_MAX_TILE_M = 1024                 # >=512-row tiles reach ~85% of HBM roofline
_VMEM_LIMIT = 32 * 1024 * 1024     # <= physical VMEM on v5e/v6e/v7x


def _cdiv(a, b):
    return -(-a // b)


def _round_up(x, m):
    return _cdiv(x, m) * m


def _pad2(a, rows, cols):
    r, c = a.shape
    if r == rows and c == cols:
        return a
    return jnp.pad(a, ((0, rows - r), (0, cols - c)))


def _pick_tile_m(m):
    """Largest row tile <= _MAX_TILE_M, >=2 tiles when feasible (v7x megacore),
    16-row aligned, with minimal row padding (m_pad never nearly doubles m)."""
    m_al = _round_up(m, _ROW_ALIGN)
    n_tiles = max(2, _cdiv(m_al, _MAX_TILE_M))
    tile = min(_round_up(_cdiv(m_al, n_tiles), _ROW_ALIGN), m_al)
    m_pad = _round_up(m_al, tile)
    return tile, m_pad


# ----------------------------------------------------------------------------
# Kernels
# ----------------------------------------------------------------------------
def _stack_kernel(x_ref, cr_ref, wx_ref, wc_ref, b_ref,
                  o_ref, sum_ref, sq_ref, *,
                  n_layers, m_valid, tile_m, mask_last):
    """Whole decoder-layer stack for one row tile + BN partial statistics.

    layer(x) = x + tanh(x @ Wx + cross @ Wc + b); all layer weights are pinned
    in VMEM.  The epilogue emits per-tile per-channel sum / sum-of-squares of
    the final activation (padded rows masked out only on the last tile).
    """
    x = x_ref[...].astype(jnp.float32)
    cr = cr_ref[...]                                    # bf16
    for l in range(n_layers):
        h = jnp.dot(x.astype(jnp.bfloat16), wx_ref[l],
                    preferred_element_type=jnp.float32)
        h = h + jnp.dot(cr, wc_ref[l], preferred_element_type=jnp.float32)
        h = h + b_ref[l]
        x = x + jnp.tanh(h)
    o_ref[...] = x.astype(o_ref.dtype)

    dp = x.shape[1]

    def write_stats(xv):
        s = jnp.sum(xv, axis=0, keepdims=True)          # (1, dp)
        q = jnp.sum(xv * xv, axis=0, keepdims=True)
        sum_ref[0] = jnp.broadcast_to(s, (8, dp))
        sq_ref[0] = jnp.broadcast_to(q, (8, dp))

    # TODO(synk): E[x^2]-mean^2 can lose precision for very large B*L with a
    # large per-channel mean; switch to per-tile centered (Chan) stats then.
    if mask_last:
        i = pl.program_id(0)
        last = pl.num_programs(0) - 1

        @pl.when(i != last)
        def _():
            write_stats(x)

        @pl.when(i == last)     # only the last tile can contain padded rows
        def _():
            row = jax.lax.broadcasted_iota(jnp.int32, x.shape, 0) + i * tile_m
            write_stats(jnp.where(row < m_valid, x, 0.0))
    else:
        write_stats(x)


def _proj_kernel(x_ref, w_ref, b_ref, o_ref):
    """Projection with BatchNorm pre-folded into (w, b): o = x @ w + b."""
    o_ref[...] = (jnp.dot(x_ref[...], w_ref[...],
                          preferred_element_type=jnp.float32)
                  + b_ref[...]).astype(o_ref.dtype)


# ----------------------------------------------------------------------------
# Forward (runs under one jax.jit)
# ----------------------------------------------------------------------------
def _decoder_forward(params, x, cross, *, c_out):
    b, l, d_model = x.shape
    d_cross = cross.shape[-1]
    m = b * l

    wx = params["wx"]                    # (n_layers, dp,  dp)  bf16
    wc = params["wc"]                    # (n_layers, dcp, dp)  bf16
    bias = params["b"]                   # (n_layers, 1,   dp)  f32
    n_layers, dp, _ = wx.shape
    dcp = wc.shape[1]
    cp = params["proj_w"].shape[1]

    tile_m, m_pad = _pick_tile_m(m)
    n_m = m_pad // tile_m

    xf = _pad2(x.reshape(m, d_model), m_pad, dp)                          # f32
    cf = _pad2(cross.reshape(m, d_cross), m_pad, dcp).astype(jnp.bfloat16)

    # ---- single fused pallas_call: layer stack + BN-stats epilogue ----
    slab, sums, sqs = pl.pallas_call(
        functools.partial(_stack_kernel, n_layers=n_layers, m_valid=m,
                          tile_m=tile_m, mask_last=(m_pad != m)),
        out_shape=(jax.ShapeDtypeStruct((m_pad, dp), jnp.bfloat16),
                   jax.ShapeDtypeStruct((n_m, 8, dp), jnp.float32),
                   jax.ShapeDtypeStruct((n_m, 8, dp), jnp.float32)),
        grid=(n_m,),
        in_specs=[
            pl.BlockSpec((tile_m, dp), lambda i: (i, 0)),
            pl.BlockSpec((tile_m, dcp), lambda i: (i, 0)),
            pl.BlockSpec((n_layers, dp, dp), lambda i: (0, 0, 0)),    # pinned
            pl.BlockSpec((n_layers, dcp, dp), lambda i: (0, 0, 0)),   # pinned
            pl.BlockSpec((n_layers, 1, dp), lambda i: (0, 0, 0)),     # pinned
        ],
        out_specs=(
            pl.BlockSpec((tile_m, dp), lambda i: (i, 0)),
            pl.BlockSpec((1, 8, dp), lambda i: (i, 0, 0)),
            pl.BlockSpec((1, 8, dp), lambda i: (i, 0, 0)),
        ),
        compiler_params=pltpu.CompilerParams(
            dimension_semantics=("parallel",),
            vmem_limit_bytes=_VMEM_LIMIT),
    )(xf, cf, wx, wc, bias)

    # ---- tiny BN fold (f32, XLA): fold scale/shift into the projection ----
    inv_m = 1.0 / m
    mean = jnp.sum(sums[:, 0, :], axis=0) * inv_m                      # (dp,)
    var = jnp.maximum(jnp.sum(sqs[:, 0, :], axis=0) * inv_m - mean * mean, 0.0)
    scale = params["bn_gamma"] * jax.lax.rsqrt(var + _BN_EPS)
    shift = params["bn_beta"] - mean * scale
    w_fold = (scale[:, None] * params["proj_w"]).astype(jnp.bfloat16)  # (dp,cp)
    b_fold = (params["proj_b"] + shift @ params["proj_w"]).reshape(1, cp)

    # ---- normalize + project is now a plain per-tile matmul ----
    out_pad = pl.pallas_call(
        _proj_kernel,
        out_shape=jax.ShapeDtypeStruct((m_pad, cp), jnp.float32),
        grid=(n_m,),
        in_specs=[
            pl.BlockSpec((tile_m, dp), lambda i: (i, 0)),
            pl.BlockSpec((dp, cp), lambda i: (0, 0)),                  # pinned
            pl.BlockSpec((1, cp), lambda i: (0, 0)),                   # pinned
        ],
        out_specs=pl.BlockSpec((tile_m, cp), lambda i: (i, 0)),
        compiler_params=pltpu.CompilerParams(
            dimension_semantics=("parallel",),
            vmem_limit_bytes=_VMEM_LIMIT),
    )(slab, w_fold, b_fold)

    return out_pad[:m, :c_out].reshape(b, l, c_out)


# ----------------------------------------------------------------------------
# Decoder container (mirrors the PyTorch module)
# ----------------------------------------------------------------------------
class DecoderPallas:
    """layers -> Transpose(1,2) ∘ BatchNorm1d(d_model) ∘ Transpose(1,2) -> Linear."""

    def __init__(self, layer_params, bn_gamma, bn_beta, proj_w, proj_b):
        assert len(layer_params) >= 1
        d_model, c_out = proj_w.shape
        d_cross = layer_params[0]["wc"].shape[0]
        dp = _round_up(d_model, _LANE)
        dcp = _round_up(d_cross, _LANE)
        cp = _round_up(c_out, _LANE)
        self.params = {
            # stacked per-layer weights, bf16 for the MXU, pinned in VMEM
            "wx": jnp.stack([_pad2(lp["wx"], dp, dp) for lp in layer_params]
                            ).astype(jnp.bfloat16),
            "wc": jnp.stack([_pad2(lp["wc"], dcp, dp) for lp in layer_params]
                            ).astype(jnp.bfloat16),
            "b": jnp.stack([_pad2(lp["b"].reshape(1, -1), 1, dp)
                            for lp in layer_params]),                  # f32
            "bn_gamma": jnp.pad(bn_gamma, (0, dp - d_model)),
            "bn_beta": jnp.pad(bn_beta, (0, dp - d_model)),
            "proj_w": _pad2(proj_w, dp, cp),                           # f32
            "proj_b": jnp.pad(proj_b, (0, cp - c_out)),
        }
        self._forward = jax.jit(
            functools.partial(_decoder_forward, c_out=c_out))

    def __call__(self, x, cross, x_mask=None, cross_mask=None):
        # masks accepted for API parity with the reference; demo layers ignore them
        return self._forward(self.params, x, cross)


# ----------------------------------------------------------------------------
# Pure-JAX reference (for correctness check)
# ----------------------------------------------------------------------------
def _reference_forward(layer_params, bn_gamma, bn_beta, proj_w, proj_b, x, cross):
    b, l, d = x.shape
    for lp in layer_params:
        h = (jnp.einsum("bld,de->ble", x, lp["wx"])
             + jnp.einsum("blc,ce->ble", cross, lp["wc"])
             + lp["b"].reshape(1, 1, -1))
        x = x + jnp.tanh(h)
    xf = x.reshape(b * l, d)
    mean = xf.mean(axis=0, keepdims=True)
    var = ((xf - mean) ** 2).mean(axis=0, keepdims=True)
    xn = (xf - mean) * jax.lax.rsqrt(var + _BN_EPS)
    xn = xn * bn_gamma.reshape(1, -1) + bn_beta.reshape(1, -1)
    out = xn @ proj_w + proj_b.reshape(1, -1)
    return out.reshape(b, l, -1)


# ----------------------------------------------------------------------------
if __name__ == "__main__":
    B, L, D_MODEL, D_CROSS, C_OUT, N_LAYERS = 2, 8, 32, 16, 8, 2

    keys = jax.random.split(jax.random.PRNGKey(0), 14)

    x = jax.random.normal(keys[0], (B, L, D_MODEL), jnp.float32)
    cross = jax.random.normal(keys[1], (B, L, D_CROSS), jnp.float32)

    layer_params = []
    for i in range(N_LAYERS):
        k1, k2, k3 = keys[4 + 3 * i], keys[5 + 3 * i], keys[6 + 3 * i]
        layer_params.append({
            "wx": 0.05 * jax.random.normal(k1, (D_MODEL, D_MODEL), jnp.float32),
            "wc": 0.05 * jax.random.normal(k2, (D_CROSS, D_MODEL), jnp.float32),
            "b": 0.01 * jax.random.normal(k3, (D_MODEL,), jnp.float32),
        })

    bn_gamma = 1.0 + 0.1 * jax.random.normal(keys[2], (D_MODEL,), jnp.float32)
    bn_beta = 0.1 * jax.random.normal(keys[3], (D_MODEL,), jnp.float32)
    proj_w = jax.random.normal(keys[10], (D_MODEL, C_OUT), jnp.float32) / jnp.sqrt(
        jnp.float32(D_MODEL))
    proj_b = jnp.zeros((C_OUT,), jnp.float32)

    decoder = DecoderPallas(layer_params, bn_gamma, bn_beta, proj_w, proj_b)

    out = jax.block_until_ready(decoder(x, cross))
    assert out.shape == (B, L, C_OUT), out.shape
    assert bool(jnp.isfinite(out).all())

    ref = _reference_forward(layer_params, bn_gamma, bn_beta, proj_w, proj_b,
                             x, cross)
    # matmul operands / inter-stage slab are bf16 (f32 accumulation), so allow
    # a 1e-1 band vs the pure-f32 reference (observed error is ~1e-2).
    err = float(jnp.max(jnp.abs(out - ref)))
    assert err < 1e-1, f"max abs err vs reference: {err}"

    # Odd-shaped batch (B*L not a tile multiple) exercises the padded-row
    # masking in the last grid tile of the fused stack kernel.
    x2 = jax.random.normal(keys[11], (3, 5, D_MODEL), jnp.float32)
    cross2 = jax.random.normal(keys[12], (3, 5, D_CROSS), jnp.float32)
    out2 = jax.block_until_ready(decoder(x2, cross2))
    assert out2.shape == (3, 5, C_OUT), out2.shape
    ref2 = _reference_forward(layer_params, bn_gamma, bn_beta, proj_w, proj_b,
                              x2, cross2)
    err2 = float(jnp.max(jnp.abs(out2 - ref2)))
    assert err2 < 1e-1, f"max abs err vs reference (odd shape): {err2}"

    print("KERNEL_OK")
</pallas_src>

<mosaic_0001>
module attributes {stable_mosaic.version = 11 : i64} {
  func.func @_stack_kernel(%arg0: i32, %arg1: memref<16x128xf32, #tpu.memory_space<vmem>>, %arg2: memref<16x128xbf16, #tpu.memory_space<vmem>>, %arg3: memref<2x128x128xbf16, #tpu.memory_space<vmem>>, %arg4: memref<2x128x128xbf16, #tpu.memory_space<vmem>>, %arg5: memref<2x1x128xf32, #tpu.memory_space<vmem>>, %arg6: memref<16x128xbf16, #tpu.memory_space<vmem>>, %arg7: memref<1x8x128xf32, #tpu.memory_space<vmem>>, %arg8: memref<1x8x128xf32, #tpu.memory_space<vmem>>) attributes {dimension_semantics = [#tpu.dimension_semantics<parallel>], iteration_bounds = array<i64: 1>, scalar_prefetch = 0 : i64, scratch_operands = 0 : i64, tpu.core_type = #tpu.core_type<tc>, window_params = [{transform_indices = @transform_0, window_bounds = array<i64: 16, 128>}, {transform_indices = @transform_1, window_bounds = array<i64: 16, 128>}, {pipeline_mode = #tpu.pipeline_mode<synchronous>, transform_indices = @transform_2, window_bounds = array<i64: 2, 128, 128>}, {pipeline_mode = #tpu.pipeline_mode<synchronous>, transform_indices = @transform_3, window_bounds = array<i64: 2, 128, 128>}, {pipeline_mode = #tpu.pipeline_mode<synchronous>, transform_indices = @transform_4, window_bounds = array<i64: 2, 1, 128>}, {transform_indices = @transform_5, window_bounds = array<i64: 16, 128>}, {transform_indices = @transform_6, window_bounds = array<i64: 1, 8, 128>}, {transform_indices = @transform_7, window_bounds = array<i64: 1, 8, 128>}]} {
    %c0 = arith.constant 0 : index
    %c0_0 = arith.constant 0 : index
    %0 = vector.load %arg1[%c0, %c0_0] : memref<16x128xf32, #tpu.memory_space<vmem>>, vector<16x128xf32>
    %c0_1 = arith.constant 0 : index
    %c0_2 = arith.constant 0 : index
    %1 = vector.load %arg2[%c0_1, %c0_2] : memref<16x128xbf16, #tpu.memory_space<vmem>>, vector<16x128xbf16>
    %2 = arith.truncf %0 : vector<16x128xf32> to vector<16x128xbf16>
    %c0_3 = arith.constant 0 : index
    %c0_4 = arith.constant 0 : index
    %c0_5 = arith.constant 0 : index
    %3 = vector.load %arg3[%c0_3, %c0_4, %c0_5] : memref<2x128x128xbf16, #tpu.memory_space<vmem>>, vector<1x128x128xbf16>
    %4 = vector.shape_cast %3 : vector<1x128x128xbf16> to vector<128x128xbf16>
    %cst = arith.constant dense<0.000000e+00> : vector<16x128xf32>
    %5 = tpu.matmul %2, %4, %cst {dimension_numbers = #tpu.dot_dimension_numbers<[1], [0], [0], [1], [0, 0, 1, 1], [], []>} : vector<16x128xbf16>, vector<128x128xbf16>, vector<16x128xf32> -> vector<16x128xf32>
    %c0_6 = arith.constant 0 : index
    %c0_7 = arith.constant 0 : index
    %c0_8 = arith.constant 0 : index
    %6 = vector.load %arg4[%c0_6, %c0_7, %c0_8] : memref<2x128x128xbf16, #tpu.memory_space<vmem>>, vector<1x128x128xbf16>
    %7 = vector.shape_cast %6 : vector<1x128x128xbf16> to vector<128x128xbf16>
    %cst_9 = arith.constant dense<0.000000e+00> : vector<16x128xf32>
    %8 = tpu.matmul %1, %7, %cst_9 {dimension_numbers = #tpu.dot_dimension_numbers<[1], [0], [0], [1], [0, 0, 1, 1], [], []>} : vector<16x128xbf16>, vector<128x128xbf16>, vector<16x128xf32> -> vector<16x128xf32>
    %9 = arith.addf %5, %8 : vector<16x128xf32>
    %c0_10 = arith.constant 0 : index
    %c0_11 = arith.constant 0 : index
    %c0_12 = arith.constant 0 : index
    %10 = vector.load %arg5[%c0_10, %c0_11, %c0_12] : memref<2x1x128xf32, #tpu.memory_space<vmem>>, vector<1x1x128xf32>
    %11 = vector.shape_cast %10 : vector<1x1x128xf32> to vector<1x128xf32>
    %12 = vector.broadcast %11 : vector<1x128xf32> to vector<16x128xf32>
    %13 = arith.addf %9, %12 : vector<16x128xf32>
    %14 = math.tanh %13 : vector<16x128xf32>
    %15 = arith.addf %0, %14 : vector<16x128xf32>
    %16 = arith.truncf %15 : vector<16x128xf32> to vector<16x128xbf16>
    %c1 = arith.constant 1 : index
    %c0_13 = arith.constant 0 : index
    %c0_14 = arith.constant 0 : index
    %17 = vector.load %arg3[%c1, %c0_13, %c0_14] : memref<2x128x128xbf16, #tpu.memory_space<vmem>>, vector<1x128x128xbf16>
    %18 = vector.shape_cast %17 : vector<1x128x128xbf16> to vector<128x128xbf16>
    %cst_15 = arith.constant dense<0.000000e+00> : vector<16x128xf32>
    %19 = tpu.matmul %16, %18, %cst_15 {dimension_numbers = #tpu.dot_dimension_numbers<[1], [0], [0], [1], [0, 0, 1, 1], [], []>} : vector<16x128xbf16>, vector<128x128xbf16>, vector<16x128xf32> -> vector<16x128xf32>
    %c1_16 = arith.constant 1 : index
    %c0_17 = arith.constant 0 : index
    %c0_18 = arith.constant 0 : index
    %20 = vector.load %arg4[%c1_16, %c0_17, %c0_18] : memref<2x128x128xbf16, #tpu.memory_space<vmem>>, vector<1x128x128xbf16>
    %21 = vector.shape_cast %20 : vector<1x128x128xbf16> to vector<128x128xbf16>
    %cst_19 = arith.constant dense<0.000000e+00> : vector<16x128xf32>
    %22 = tpu.matmul %1, %21, %cst_19 {dimension_numbers = #tpu.dot_dimension_numbers<[1], [0], [0], [1], [0, 0, 1, 1], [], []>} : vector<16x128xbf16>, vector<128x128xbf16>, vector<16x128xf32> -> vector<16x128xf32>
    %23 = arith.addf %19, %22 : vector<16x128xf32>
    %c1_20 = arith.constant 1 : index
    %c0_21 = arith.constant 0 : index
    %c0_22 = arith.constant 0 : index
    %24 = vector.load %arg5[%c1_20, %c0_21, %c0_22] : memref<2x1x128xf32, #tpu.memory_space<vmem>>, vector<1x1x128xf32>
    %25 = vector.shape_cast %24 : vector<1x1x128xf32> to vector<1x128xf32>
    %26 = vector.broadcast %25 : vector<1x128xf32> to vector<16x128xf32>
    %27 = arith.addf %23, %26 : vector<16x128xf32>
    %28 = math.tanh %27 : vector<16x128xf32>
    %29 = arith.addf %15, %28 : vector<16x128xf32>
    %30 = arith.truncf %29 : vector<16x128xf32> to vector<16x128xbf16>
    %c0_23 = arith.constant 0 : index
    %c0_24 = arith.constant 0 : index
    %31 = vector.load %arg6[%c0_23, %c0_24] : memref<16x128xbf16, #tpu.memory_space<vmem>>, vector<16x128xbf16>
    tpu.vector_store %arg6[%c0_23, %c0_24], %30 {strides = array<i32>} : memref<16x128xbf16, #tpu.memory_space<vmem>>, vector<16x128xbf16>,
    %cst_25 = arith.constant dense<0.000000e+00> : vector<128xf32>
    %32 = vector.multi_reduction <add>, %29, %cst_25 [0] : vector<16x128xf32> to vector<128xf32>
    %33 = vector.shape_cast %32 : vector<128xf32> to vector<1x128xf32>
    %34 = arith.mulf %29, %29 : vector<16x128xf32>
    %cst_26 = arith.constant dense<0.000000e+00> : vector<128xf32>
    %35 = vector.multi_reduction <add>, %34, %cst_26 [0] : vector<16x128xf32> to vector<128xf32>
    %36 = vector.shape_cast %35 : vector<128xf32> to vector<1x128xf32>
    %37 = vector.shape_cast %33 : vector<1x128xf32> to vector<1x128xf32>
    %38 = vector.broadcast %37 : vector<1x128xf32> to vector<8x128xf32>
    %c0_27 = arith.constant 0 : index
    %c0_28 = arith.constant 0 : index
    %c0_29 = arith.constant 0 : index
    %39 = vector.load %arg7[%c0_27, %c0_28, %c0_29] : memref<1x8x128xf32, #tpu.memory_space<vmem>>, vector<1x8x128xf32>
    %40 = vector.shape_cast %39 : vector<1x8x128xf32> to vector<8x128xf32>
    %41 = vector.shape_cast %38 : vector<8x128xf32> to vector<1x8x128xf32>
    tpu.vector_store %arg7[%c0_27, %c0_28, %c0_29], %41 {strides = array<i32>} : memref<1x8x128xf32, #tpu.memory_space<vmem>>, vector<1x8x128xf32>,
    %42 = vector.shape_cast %36 : vector<1x128xf32> to vector<1x128xf32>
    %43 = vector.broadcast %42 : vector<1x128xf32> to vector<8x128xf32>
    %c0_30 = arith.constant 0 : index
    %c0_31 = arith.constant 0 : index
    %c0_32 = arith.constant 0 : index
    %44 = vector.load %arg8[%c0_30, %c0_31, %c0_32] : memref<1x8x128xf32, #tpu.memory_space<vmem>>, vector<1x8x128xf32>
    %45 = vector.shape_cast %44 : vector<1x8x128xf32> to vector<8x128xf32>
    %46 = vector.shape_cast %43 : vector<8x128xf32> to vector<1x8x128xf32>
    tpu.vector_store %arg8[%c0_30, %c0_31, %c0_32], %46 {strides = array<i32>} : memref<1x8x128xf32, #tpu.memory_space<vmem>>, vector<1x8x128xf32>,
    return
  }
  func.func @transform_0(%arg0: i32) -> (i32, i32) {
    %c0_i32 = arith.constant 0 : i32
    %c0_i32_0 = arith.constant 0 : i32
    return %arg0, %c0_i32 : i32, i32
  }
  func.func @transform_1(%arg0: i32) -> (i32, i32) {
    %c0_i32 = arith.constant 0 : i32
    %c0_i32_0 = arith.constant 0 : i32
    return %arg0, %c0_i32 : i32, i32
  }
  func.func @transform_2(%arg0: i32) -> (i32, i32, i32) {
    %c0_i32 = arith.constant 0 : i32
    %c0_i32_0 = arith.constant 0 : i32
    %c0_i32_1 = arith.constant 0 : i32
    %c0_i32_2 = arith.constant 0 : i32
    return %c0_i32, %c0_i32_0, %c0_i32_1 : i32, i32, i32
  }
  func.func @transform_3(%arg0: i32) -> (i32, i32, i32) {
    %c0_i32 = arith.constant 0 : i32
    %c0_i32_0 = arith.constant 0 : i32
    %c0_i32_1 = arith.constant 0 : i32
    %c0_i32_2 = arith.constant 0 : i32
    return %c0_i32, %c0_i32_0, %c0_i32_1 : i32, i32, i32
  }
  func.func @transform_4(%arg0: i32) -> (i32, i32, i32) {
    %c0_i32 = arith.constant 0 : i32
    %c0_i32_0 = arith.constant 0 : i32
    %c0_i32_1 = arith.constant 0 : i32
    %c0_i32_2 = arith.constant 0 : i32
    return %c0_i32, %c0_i32_0, %c0_i32_1 : i32, i32, i32
  }
  func.func @transform_5(%arg0: i32) -> (i32, i32) {
    %c0_i32 = arith.constant 0 : i32
    %c0_i32_0 = arith.constant 0 : i32
    return %arg0, %c0_i32 : i32, i32
  }
  func.func @transform_6(%arg0: i32) -> (i32, i32, i32) {
    %c0_i32 = arith.constant 0 : i32
    %c0_i32_0 = arith.constant 0 : i32
    %c0_i32_1 = arith.constant 0 : i32
    return %arg0, %c0_i32, %c0_i32_0 : i32, i32, i32
  }
  func.func @transform_7(%arg0: i32) -> (i32, i32, i32) {
    %c0_i32 = arith.constant 0 : i32
    %c0_i32_0 = arith.constant 0 : i32
    %c0_i32_1 = arith.constant 0 : i32
    return %arg0, %c0_i32, %c0_i32_0 : i32, i32, i32
  }
}

module attributes {stable_mosaic.version = 11 : i64} {
  func.func @_proj_kernel(%arg0: i32, %arg1: memref<16x128xbf16, #tpu.memory_space<vmem>>, %arg2: memref<128x128xbf16, #tpu.memory_space<vmem>>, %arg3: memref<1x128xf32, #tpu.memory_space<vmem>>, %arg4: memref<16x128xf32, #tpu.memory_space<vmem>>) attributes {dimension_semantics = [#tpu.dimension_semantics<parallel>], iteration_bounds = array<i64: 1>, scalar_prefetch = 0 : i64, scratch_operands = 0 : i64, tpu.core_type = #tpu.core_type<tc>, window_params = [{transform_indices = @transform_0, window_bounds = array<i64: 16, 128>}, {pipeline_mode = #tpu.pipeline_mode<synchronous>, transform_indices = @transform_1, window_bounds = array<i64: 128, 128>}, {pipeline_mode = #tpu.pipeline_mode<synchronous>, transform_indices = @transform_2, window_bounds = array<i64: 1, 128>}, {transform_indices = @transform_3, window_bounds = array<i64: 16, 128>}]} {
    %c0 = arith.constant 0 : index
    %c0_0 = arith.constant 0 : index
    %0 = vector.load %arg1[%c0, %c0_0] : memref<16x128xbf16, #tpu.memory_space<vmem>>, vector<16x128xbf16>
    %c0_1 = arith.constant 0 : index
    %c0_2 = arith.constant 0 : index
    %1 = vector.load %arg2[%c0_1, %c0_2] : memref<128x128xbf16, #tpu.memory_space<vmem>>, vector<128x128xbf16>
    %cst = arith.constant dense<0.000000e+00> : vector<16x128xf32>
    %2 = tpu.matmul %0, %1, %cst {dimension_numbers = #tpu.dot_dimension_numbers<[1], [0], [0], [1], [0, 0, 1, 1], [], []>} : vector<16x128xbf16>, vector<128x128xbf16>, vector<16x128xf32> -> vector<16x128xf32>
    %c0_3 = arith.constant 0 : index
    %c0_4 = arith.constant 0 : index
    %3 = vector.load %arg3[%c0_3, %c0_4] : memref<1x128xf32, #tpu.memory_space<vmem>>, vector<1x128xf32>
    %4 = vector.broadcast %3 : vector<1x128xf32> to vector<16x128xf32>
    %5 = arith.addf %2, %4 : vector<16x128xf32>
    %c0_5 = arith.constant 0 : index
    %c0_6 = arith.constant 0 : index
    %6 = vector.load %arg4[%c0_5, %c0_6] : memref<16x128xf32, #tpu.memory_space<vmem>>, vector<16x128xf32>
    tpu.vector_store %arg4[%c0_5, %c0_6], %5 {strides = array<i32>} : memref<16x128xf32, #tpu.memory_space<vmem>>, vector<16x128xf32>,
    return
  }
  func.func @transform_0(%arg0: i32) -> (i32, i32) {
    %c0_i32 = arith.constant 0 : i32
    %c0_i32_0 = arith.constant 0 : i32
    return %arg0, %c0_i32 : i32, i32
  }
  func.func @transform_1(%arg0: i32) -> (i32, i32) {
    %c0_i32 = arith.constant 0 : i32
    %c0_i32_0 = arith.constant 0 : i32
    %c0_i32_1 = arith.constant 0 : i32
    return %c0_i32, %c0_i32_0 : i32, i32
  }
  func.func @transform_2(%arg0: i32) -> (i32, i32) {
    %c0_i32 = arith.constant 0 : i32
    %c0_i32_0 = arith.constant 0 : i32
    %c0_i32_1 = arith.constant 0 : i32
    return %c0_i32, %c0_i32_0 : i32, i32
  }
  func.func @transform_3(%arg0: i32) -> (i32, i32) {
    %c0_i32 = arith.constant 0 : i32
    %c0_i32_0 = arith.constant 0 : i32
    return %arg0, %c0_i32 : i32, i32
  }
}

</mosaic_0001>

<llo_original>
// kernel: _decoder_forward.3
$region0: #{_decoder_forward.3}
  #allocation0 [shape = 'u32[]', space=smem, size = 0x4, offset = 0x4, fixed_abs, tag = 'smem constant byte address 0x4 - core index']
  #allocation1 [shape = 'u32[144,128]{1,0:T(1,128)}', space=vmem, size = 0x12000, scoped, tag = 'internal scratch']
  %s0 = inlined_call_operand.vmem [shape: bf16[16,128], index: 0, kind: input, shape index: {}]
  %s1 = inlined_call_operand.vmem [shape: bf16[128,128], index: 1, kind: input, shape index: {}]
  %s2 = inlined_call_operand.vmem [shape: f32[1,128], index: 2, kind: input, shape index: {}]
  %s3 = inlined_call_operand.vmem [shape: f32[16,128], index: 3, kind: output, shape index: {}]
  %s4 = sld [smem:[#allocation0]]
  $region22: #{_decoder_forward.3} parent=0
    _
  %s6 = ssub.s32 1, %s4
  %s7 = scalar_select 0, %s6, %s4
  // Predicated region
  $region2: #{_decoder_forward.3} parent=0 // pred_check
    _
  $region3: #{_decoder_forward.3} parent=0 // pred_check_branch
    %9 = sbr.rel (0) target = $region5
  $region4: #{_decoder_forward.3} parent=0 // pred_region
    _
  $region5: #{_decoder_forward.3} parent=0 // pred_fallthru
    _
  // Predicated region
  $region6: #{_decoder_forward.3} parent=0 // pred_check
    _
  $region7: #{_decoder_forward.3} parent=0 // pred_check_branch
    %11 = sbr.rel (0) target = $region9
  $region8: #{_decoder_forward.3} parent=0 // pred_region
    _
  $region9: #{_decoder_forward.3} parent=0 // pred_fallthru
    _
  // Predicated region
  $region10: #{_decoder_forward.3} parent=0 // pred_check
    _
  $region11: #{_decoder_forward.3} parent=0 // pred_check_branch
    %13 = sbr.rel (0) target = $region13
  $region12: #{_decoder_forward.3} parent=0 // pred_region
    _
  $region13: #{_decoder_forward.3} parent=0 // pred_fallthru
    _
  %v15 = vld [vmem:[%s0] sm:$0xf]
  %v16 = vld [vmem:[%s0 + $0x4] sm:$0xf]
  %v17 = vld [vmem:[%s1] sm:$0xf]
  %v18 = vld [vmem:[%s1 + $0x4] sm:$0xf]
  %v19 = vld [vmem:[%s1 + $0x8] sm:$0xf]
  %v20 = vld [vmem:[%s1 + $0xc] sm:$0xf]
  %v21 = vld [vmem:[%s1 + $0x10] sm:$0xf]
  %v22 = vld [vmem:[%s1 + $0x14] sm:$0xf]
  %v23 = vld [vmem:[%s1 + $0x18] sm:$0xf]
  %v24 = vld [vmem:[%s1 + $0x1c] sm:$0xf]
  %v25 = vld [vmem:[%s1 + $0x20] sm:$0xf]
  %v26 = vld [vmem:[%s1 + $0x24] sm:$0xf]
  %v27 = vld [vmem:[%s1 + $0x28] sm:$0xf]
  %v28 = vld [vmem:[%s1 + $0x2c] sm:$0xf]
  %v29 = vld [vmem:[%s1 + $0x30] sm:$0xf]
  %v30 = vld [vmem:[%s1 + $0x34] sm:$0xf]
  %v31 = vld [vmem:[%s1 + $0x38] sm:$0xf]
  %v32 = vld [vmem:[%s1 + $0x3c] sm:$0xf]
  %v33 = vld [vmem:[%s2] sm:$0x1]
  %v35 = vlaneseq
  %v36 = vshrl.u32 %v35, 7
  %v37 = vsub.s32 0, %v36
  %v38 = vrot.slane %v33, %v37
  %v42 = vunpack.c.l.b16 %v15
  %v43 = vunpack.c.l.b16 %v16
  %v44 = vpack.c.b16 %v43, %v42
  %v62 = vunpack.c.l.b16 %v17
  %v63 = vunpack.c.l.b16 %v18
  %v64 = vunpack.c.l.b16 %v19
  %v65 = vunpack.c.l.b16 %v20
  %v66 = vunpack.c.l.b16 %v21
  %v67 = vunpack.c.l.b16 %v22
  %v68 = vunpack.c.l.b16 %v23
  %v69 = vunpack.c.l.b16 %v24
  %v70 = vunpack.c.l.b16 %v25
  %v71 = vunpack.c.l.b16 %v26
  %v72 = vunpack.c.l.b16 %v27
  %v73 = vunpack.c.l.b16 %v28
  %v74 = vunpack.c.l.b16 %v29
  %v75 = vunpack.c.l.b16 %v30
  %v76 = vunpack.c.l.b16 %v31
  %v77 = vunpack.c.l.b16 %v32
  %v78 = vpack.c.b16 %v63, %v62
  %v79 = vpack.c.b16 %v65, %v64
  %v80 = vpack.c.b16 %v67, %v66
  %v81 = vpack.c.b16 %v69, %v68
  %v82 = vpack.c.b16 %v71, %v70
  %v83 = vpack.c.b16 %v73, %v72
  %v84 = vpack.c.b16 %v75, %v74
  %v85 = vpack.c.b16 %v77, %v76
  %94 = vmatprep.subr.bf16.mxu0 0
  %95 = vmatpush1.bf16.msra.mxu0 %v85
  %96 = vmatprep.subr.bf16.mxu0 0
  %97 = vmatpush1.bf16.msra.mxu0 %v84
  %98 = vmatprep.subr.bf16.mxu0 0
  %99 = vmatpush1.bf16.msra.mxu0 %v83
  %100 = vmatprep.subr.bf16.mxu0 0
  %101 = vmatpush1.bf16.msra.mxu0 %v82
  %102 = vmatprep.subr.bf16.mxu0 0
  %103 = vmatpush1.bf16.msra.mxu0 %v81
  %104 = vmatprep.subr.bf16.mxu0 0
  %105 = vmatpush1.bf16.msra.mxu0 %v80
  %106 = vmatprep.subr.bf16.mxu0 0
  %107 = vmatpush1.bf16.msra.mxu0 %v79
  %108 = vmatprep.subr.bf16.mxu0 0
  %109 = vmatpush1.bf16.msra.mxu0 %v78
  %110 = vmatprep.subr.bf16.mxu0 0
  %111 = vmatpush2.bf16.msra.mxu0 0
  %112 = vmatprep.subr.bf16.mxu0 0
  %113 = vmatpush2.bf16.msra.mxu0 0
  %114 = vmatprep.subr.bf16.mxu0 0
  %115 = vmatpush2.bf16.msra.mxu0 0
  %116 = vmatprep.subr.bf16.mxu0 0
  %117 = vmatpush2.bf16.msra.mxu0 0
  %118 = vmatprep.subr.bf16.mxu0 0
  %119 = vmatpush2.bf16.msra.mxu0 0
  %120 = vmatprep.subr.bf16.mxu0 0
  %121 = vmatpush2.bf16.msra.mxu0 0
  %122 = vmatprep.subr.bf16.mxu0 0
  %123 = vmatpush2.bf16.msra.mxu0 0
  %124 = vmatprep.subr.bf16.mxu0 0
  %125 = vmatpush2.bf16.msra.mxu0 0
  %126 = vmatprep.mubr.bf16.mxu0 0
  %127 = vmatmul.mubr.bf16.gmra.mxu0 %v44
  %v128 = vpop.f32.mrf.mxu0
  %v129 = vadd.f32 %v38, %v128
  %v130 = vpop.f32.mrf.mxu0
  %v131 = vpop.f32.mrf.mxu0
  %v132 = vadd.f32 %v38, %v131
  %v133 = vpop.f32.mrf.mxu0
  %134 = vdwg.mxu0
  %135 = vst [vmem:[%s3] sm:$0xff] %v129
  %136 = vst [vmem:[%s3 + $0x8] sm:$0xff] %v132
  // Predicated region
  $region14: #{_decoder_forward.3} parent=0 // pred_check
    _
  $region15: #{_decoder_forward.3} parent=0 // pred_check_branch
    %138 = sbr.rel (0) target = $region17
  $region16: #{_decoder_forward.3} parent=0 // pred_region
    _
  $region17: #{_decoder_forward.3} parent=0 // pred_fallthru
    _
  // Predicated region
  $region18: #{_decoder_forward.3} parent=0 // pred_check
    _
  $region19: #{_decoder_forward.3} parent=0 // pred_check_branch
    %140 = sbr.rel (0) target = $region21
  $region20: #{_decoder_forward.3} parent=0 // pred_region
    _
  $region21: #{_decoder_forward.3} parent=0 // pred_fallthru
    _

// kernel: _decoder_forward.2
$region0: #{_decoder_forward.2}
  #allocation0 [shape = 'u32[]', space=smem, size = 0x4, offset = 0x4, fixed_abs, tag = 'smem constant byte address 0x4 - core index']
  #allocation1 [shape = 'u32[144,128]{1,0:T(1,128)}', space=vmem, size = 0x12000, scoped, tag = 'internal scratch']
  %s0 = inlined_call_operand.vmem [shape: f32[16,128], index: 0, kind: input, shape index: {}]
  %s1 = inlined_call_operand.vmem [shape: bf16[16,128], index: 1, kind: input, shape index: {}]
  %s2 = inlined_call_operand.hbm [shape: bf16[2,128,128], index: 2, kind: input, shape index: {}]
  %s3 = inlined_call_operand.hbm [shape: bf16[2,128,128], index: 3, kind: input, shape index: {}]
  %s4 = inlined_call_operand.vmem [shape: f32[2,1,128], index: 4, kind: input, shape index: {}]
  %s5 = inlined_call_operand.vmem [shape: bf16[16,128], index: 5, kind: output, shape index: {0}]
  %s6 = inlined_call_operand.vmem [shape: f32[1,8,128], index: 6, kind: output, shape index: {1}]
  %s7 = inlined_call_operand.vmem [shape: f32[1,8,128], index: 7, kind: output, shape index: {2}]
  %8 = xla_tuple %s5, %s6, %s7
  %s9 = sld [smem:[#allocation0]]
  $region54: #{_decoder_forward.2} parent=0
    _
  %s11 = ssub.s32 1, %s9
  %s12 = scalar_select 0, %s11, %s9
  $region1: #{_decoder_forward.2} parent=0
    #allocation2 [shape = 'u8[65536]{0}', space=vmem, size = 0x10000, scoped, tag = 'input window, operand 2, single buffered']
    #allocation3 [shape = 's32[1]{0}', space=sflag, size = 0x4, scoped, tag = 'scoped memory for _decoder_forward.2']
    #allocation4 [shape = 'u8[65536]{0}', space=vmem, size = 0x10000, scoped, tag = 'input window, operand 3, single buffered']
    #allocation5 [shape = 's32[1]{0}', space=sflag, size = 0x4, scoped, tag = 'scoped memory for _decoder_forward.2']
    %13 = vsyncpa [#allocation3], 0
    %14 = vsyncpa [#allocation5], 0
    // Predicated region
    $region2: #{_decoder_forward.2} parent=1 // pred_check
      _
    $region3: #{_decoder_forward.2} parent=1 // pred_check_branch
      %16 = sbr.rel (0) target = $region5
    $region4: #{_decoder_forward.2} parent=1 // pred_region
      _
    $region5: #{_decoder_forward.2} parent=1 // pred_fallthru
      _
    // Predicated region
    $region6: #{_decoder_forward.2} parent=1 // pred_check
      _
    $region7: #{_decoder_forward.2} parent=1 // pred_check_branch
      %18 = sbr.rel (0) target = $region9
    $region8: #{_decoder_forward.2} parent=1 // pred_region
      _
    $region9: #{_decoder_forward.2} parent=1 // pred_fallthru
      _
    // Predicated region
    $region10: #{_decoder_forward.2} parent=1 // pred_check
      _
    $region11: #{_decoder_forward.2} parent=1 // pred_check_branch
      %20 = sbr.rel (0) target = $region13
    $region12: #{_decoder_forward.2} parent=1 // pred_region
      %s22 = ssub.s32 2048, 2048
      %23 = vsyncadd [#allocation3], %s22
      %s24 = sshll.u32 [#allocation2], 4
      %s25 = int_to_ptr.vmem [resolvable:$true] %s24
      %30 = dma.hbm_to_vmem [thread:$0]  %s2, 2048, %s25, [#allocation3], 64, 64, 4
    $region13: #{_decoder_forward.2} parent=1 // pred_fallthru
      _
    // Predicated region
    $region14: #{_decoder_forward.2} parent=1 // pred_check
      _
    $region15: #{_decoder_forward.2} parent=1 // pred_check_branch
      %32 = sbr.rel (0) target = $region17
    $region16: #{_decoder_forward.2} parent=1 // pred_region
      %s34 = ssub.s32 2048, 2048
      %35 = vsyncadd [#allocation5], %s34
      %s36 = sshll.u32 [#allocation4], 4
      %s37 = int_to_ptr.vmem [resolvable:$true] %s36
      %42 = dma.hbm_to_vmem [thread:$0]  %s3, 2048, %s37, [#allocation5], 64, 64, 4
    $region17: #{_decoder_forward.2} parent=1 // pred_fallthru
      _
    // Predicated region
    $region18: #{_decoder_forward.2} parent=1 // pred_check
      _
    $region19: #{_decoder_forward.2} parent=1 // pred_check_branch
      %44 = sbr.rel (0) target = $region21
    $region20: #{_decoder_forward.2} parent=1 // pred_region
      _
    $region21: #{_decoder_forward.2} parent=1 // pred_fallthru
      _
    // Predicated region
    $region22: #{_decoder_forward.2} parent=1 // pred_check
      _
    $region23: #{_decoder_forward.2} parent=1 // pred_check_branch
      %46 = sbr.rel (0) target = $region25
    $region24: #{_decoder_forward.2} parent=1 // pred_region
      %47 = dma.done [#allocation3], 2048
    $region25: #{_decoder_forward.2} parent=1 // pred_fallthru
      _
    // Predicated region
    $region26: #{_decoder_forward.2} parent=1 // pred_check
      _
    $region27: #{_decoder_forward.2} parent=1 // pred_check_branch
      %49 = sbr.rel (0) target = $region29
    $region28: #{_decoder_forward.2} parent=1 // pred_region
      %50 = dma.done [#allocation5], 2048
    $region29: #{_decoder_forward.2} parent=1 // pred_fallthru
      _
    %v52 = vld [vmem:[%s0] sm:$0xff]
    %v53 = vld [vmem:[%s0 + $0x8] sm:$0xff]
    %v54 = vld [vmem:[%s1] sm:$0xf]
    %v55 = vld [vmem:[%s1 + $0x4] sm:$0xf]
    %v56 = vpack.c.bf16 %v53, %v52
    %v57 = vld [vmem:[#allocation2] sm:$0xf]
    %v58 = vld [vmem:[#allocation2 + $0x4] sm:$0xf]
    %v59 = vld [vmem:[#allocation2 + $0x8] sm:$0xf]
    %v60 = vld [vmem:[#allocation2 + $0xc] sm:$0xf]
    %v61 = vld [vmem:[#allocation2 + $0x10] sm:$0xf]
    %v62 = vld [vmem:[#allocation2 + $0x14] sm:$0xf]
    %v63 = vld [vmem:[#allocation2 + $0x18] sm:$0xf]
    %v64 = vld [vmem:[#allocation2 + $0x1c] sm:$0xf]
    %v65 = vld [vmem:[#allocation2 + $0x20] sm:$0xf]
    %v66 = vld [vmem:[#allocation2 + $0x24] sm:$0xf]
    %v67 = vld [vmem:[#allocation2 + $0x28] sm:$0xf]
    %v68 = vld [vmem:[#allocation2 + $0x2c] sm:$0xf]
    %v69 = vld [vmem:[#allocation2 + $0x30] sm:$0xf]
    %v70 = vld [vmem:[#allocation2 + $0x34] sm:$0xf]
    %v71 = vld [vmem:[#allocation2 + $0x38] sm:$0xf]
    %v72 = vld [vmem:[#allocation2 + $0x3c] sm:$0xf]
    %v73 = vld [vmem:[#allocation4] sm:$0xf]
    %v74 = vld [vmem:[#allocation4 + $0x4] sm:$0xf]
    %v75 = vld [vmem:[#allocation4 + $0x8] sm:$0xf]
    %v76 = vld [vmem:[#allocation4 + $0xc] sm:$0xf]
    %v77 = vld [vmem:[#allocation4 + $0x10] sm:$0xf]
    %v78 = vld [vmem:[#allocation4 + $0x14] sm:$0xf]
    %v79 = vld [vmem:[#allocation4 + $0x18] sm:$0xf]
    %v80 = vld [vmem:[#allocation4 + $0x1c] sm:$0xf]
    %v81 = vld [vmem:[#allocation4 + $0x20] sm:$0xf]
    %v82 = vld [vmem:[#allocation4 + $0x24] sm:$0xf]
    %v83 = vld [vmem:[#allocation4 + $0x28] sm:$0xf]
    %v84 = vld [vmem:[#allocation4 + $0x2c] sm:$0xf]
    %v85 = vld [vmem:[#allocation4 + $0x30] sm:$0xf]
    %v86 = vld [vmem:[#allocation4 + $0x34] sm:$0xf]
    %v87 = vld [vmem:[#allocation4 + $0x38] sm:$0xf]
    %v88 = vld [vmem:[#allocation4 + $0x3c] sm:$0xf]
    %v91 = vunpack.c.l.b16 %v54
    %v92 = vunpack.c.l.b16 %v55
    %v93 = vpack.c.b16 %v92, %v91
    %v111 = vunpack.c.l.b16 %v73
    %v112 = vunpack.c.l.b16 %v74
    %v113 = vunpack.c.l.b16 %v75
    %v114 = vunpack.c.l.b16 %v76
    %v115 = vunpack.c.l.b16 %v77
    %v116 = vunpack.c.l.b16 %v78
    %v117 = vunpack.c.l.b16 %v79
    %v118 = vunpack.c.l.b16 %v80
    %v119 = vunpack.c.l.b16 %v81
    %v120 = vunpack.c.l.b16 %v82
    %v121 = vunpack.c.l.b16 %v83
    %v122 = vunpack.c.l.b16 %v84
    %v123 = vunpack.c.l.b16 %v85
    %v124 = vunpack.c.l.b16 %v86
    %v125 = vunpack.c.l.b16 %v87
    %v126 = vunpack.c.l.b16 %v88
    %v127 = vpack.c.b16 %v112, %v111
    %v128 = vpack.c.b16 %v114, %v113
    %v129 = vpack.c.b16 %v116, %v115
    %v130 = vpack.c.b16 %v118, %v117
    %v131 = vpack.c.b16 %v120, %v119
    %v132 = vpack.c.b16 %v122, %v121
    %v133 = vpack.c.b16 %v124, %v123
    %v134 = vpack.c.b16 %v126, %v125
    %143 = vmatprep.subr.bf16.mxu0 0
    %144 = vmatpush1.bf16.msra.mxu0 %v134
    %145 = vmatprep.subr.bf16.mxu0 0
    %146 = vmatpush1.bf16.msra.mxu0 %v133
    %147 = vmatprep.subr.bf16.mxu0 0
    %148 = vmatpush1.bf16.msra.mxu0 %v132
    %149 = vmatprep.subr.bf16.mxu0 0
    %150 = vmatpush1.bf16.msra.mxu0 %v131
    %151 = vmatprep.subr.bf16.mxu0 0
    %152 = vmatpush1.bf16.msra.mxu0 %v130
    %153 = vmatprep.subr.bf16.mxu0 0
    %154 = vmatpush1.bf16.msra.mxu0 %v129
    %155 = vmatprep.subr.bf16.mxu0 0
    %156 = vmatpush1.bf16.msra.mxu0 %v128
    %157 = vmatprep.subr.bf16.mxu0 0
    %158 = vmatpush1.bf16.msra.mxu0 %v127
    %159 = vmatprep.subr.bf16.mxu0 0
    %160 = vmatpush2.bf16.msra.mxu0 0
    %161 = vmatprep.subr.bf16.mxu0 0
    %162 = vmatpush2.bf16.msra.mxu0 0
    %163 = vmatprep.subr.bf16.mxu0 0
    %164 = vmatpush2.bf16.msra.mxu0 0
    %165 = vmatprep.subr.bf16.mxu0 0
    %166 = vmatpush2.bf16.msra.mxu0 0
    %167 = vmatprep.subr.bf16.mxu0 0
    %168 = vmatpush2.bf16.msra.mxu0 0
    %169 = vmatprep.subr.bf16.mxu0 0
    %170 = vmatpush2.bf16.msra.mxu0 0
    %171 = vmatprep.subr.bf16.mxu0 0
    %172 = vmatpush2.bf16.msra.mxu0 0
    %173 = vmatprep.subr.bf16.mxu0 0
    %174 = vmatpush2.bf16.msra.mxu0 0
    %175 = vmatprep.mubr.bf16.mxu0 0
    %176 = vmatmul.mubr.bf16.gmra.mxu0 %v93
    %v177 = vpop.f32.mrf.mxu0
    %v178 = vadd.f32 0.0, %v177
    %v179 = vpop.f32.mrf.mxu0
    %v180 = vpop.f32.mrf.mxu0
    %v181 = vadd.f32 0.0, %v180
    %v182 = vpop.f32.mrf.mxu0
    %183 = vdwg.mxu0
    %v200 = vunpack.c.l.b16 %v57
    %v201 = vunpack.c.l.b16 %v58
    %v202 = vunpack.c.l.b16 %v59
    %v203 = vunpack.c.l.b16 %v60
    %v204 = vunpack.c.l.b16 %v61
    %v205 = vunpack.c.l.b16 %v62
    %v206 = vunpack.c.l.b16 %v63
    %v207 = vunpack.c.l.b16 %v64
    %v208 = vunpack.c.l.b16 %v65
    %v209 = vunpack.c.l.b16 %v66
    %v210 = vunpack.c.l.b16 %v67
    %v211 = vunpack.c.l.b16 %v68
    %v212 = vunpack.c.l.b16 %v69
    %v213 = vunpack.c.l.b16 %v70
    %v214 = vunpack.c.l.b16 %v71
    %v215 = vunpack.c.l.b16 %v72
    %v216 = vpack.c.b16 %v201, %v200
    %v217 = vpack.c.b16 %v203, %v202
    %v218 = vpack.c.b16 %v205, %v204
    %v219 = vpack.c.b16 %v207, %v206
    %v220 = vpack.c.b16 %v209, %v208
    %v221 = vpack.c.b16 %v211, %v210
    %v222 = vpack.c.b16 %v213, %v212
    %v223 = vpack.c.b16 %v215, %v214
    %232 = vmatprep.subr.bf16.mxu0 0
    %233 = vmatpush1.bf16.msra.mxu0 %v223
    %234 = vmatprep.subr.bf16.mxu0 0
    %235 = vmatpush1.bf16.msra.mxu0 %v222
    %236 = vmatprep.subr.bf16.mxu0 0
    %237 = vmatpush1.bf16.msra.mxu0 %v221
    %238 = vmatprep.subr.bf16.mxu0 0
    %239 = vmatpush1.bf16.msra.mxu0 %v220
    %240 = vmatprep.subr.bf16.mxu0 0
    %241 = vmatpush1.bf16.msra.mxu0 %v219
    %242 = vmatprep.subr.bf16.mxu0 0
    %243 = vmatpush1.bf16.msra.mxu0 %v218
    %244 = vmatprep.subr.bf16.mxu0 0
    %245 = vmatpush1.bf16.msra.mxu0 %v217
    %246 = vmatprep.subr.bf16.mxu0 0
    %247 = vmatpush1.bf16.msra.mxu0 %v216
    %248 = vmatprep.subr.bf16.mxu0 0
    %249 = vmatpush2.bf16.msra.mxu0 0
    %250 = vmatprep.subr.bf16.mxu0 0
    %251 = vmatpush2.bf16.msra.mxu0 0
    %252 = vmatprep.subr.bf16.mxu0 0
    %253 = vmatpush2.bf16.msra.mxu0 0
    %254 = vmatprep.subr.bf16.mxu0 0
    %255 = vmatpush2.bf16.msra.mxu0 0
    %256 = vmatprep.subr.bf16.mxu0 0
    %257 = vmatpush2.bf16.msra.mxu0 0
    %258 = vmatprep.subr.bf16.mxu0 0
    %259 = vmatpush2.bf16.msra.mxu0 0
    %260 = vmatprep.subr.bf16.mxu0 0
    %261 = vmatpush2.bf16.msra.mxu0 0
    %262 = vmatprep.subr.bf16.mxu0 0
    %263 = vmatpush2.bf16.msra.mxu0 0
    %264 = vmatprep.mubr.bf16.mxu0 0
    %265 = vmatmul.mubr.bf16.gmra.mxu0 %v56
    %v266 = vpop.f32.mrf.mxu0
    %v267 = vadd.f32 %v178, %v266
    %v268 = vpop.f32.mrf.mxu0
    %v269 = vpop.f32.mrf.mxu0
    %v270 = vadd.f32 %v181, %v269
    %v271 = vpop.f32.mrf.mxu0
    %272 = vdwg.mxu0
    %v273 = vld [vmem:[%s4] sm:$0x1]
    %v275 = vlaneseq
    %v276 = vshrl.u32 %v275, 7
    %v277 = vsub.s32 0, %v276
    %v278 = vrot.slane %v273, %v277
    %v280 = vadd.f32 %v267, %v278
    %v281 = vadd.f32 %v270, %v278
    %v282 = vtanh.pop %v280
    %v283 = vtanh.pop %v281
    %v284 = vadd.f32 %v52, %v282
    %v285 = vadd.f32 %v53, %v283
    %v286 = vpack.c.bf16 %v285, %v284
    %s287 = scalar_lea.vmem [#allocation2], 64
    %v288 = vld [vmem:[%s287] sm:$0xf]
    %v289 = vld [vmem:[%s287 + $0x4] sm:$0xf]
    %v290 = vld [vmem:[%s287 + $0x8] sm:$0xf]
    %v291 = vld [vmem:[%s287 + $0xc] sm:$0xf]
    %v292 = vld [vmem:[%s287 + $0x10] sm:$0xf]
    %v293 = vld [vmem:[%s287 + $0x14] sm:$0xf]
    %v294 = vld [vmem:[%s287 + $0x18] sm:$0xf]
    %v295 = vld [vmem:[%s287 + $0x1c] sm:$0xf]
    %v296 = vld [vmem:[%s287 + $0x20] sm:$0xf]
    %v297 = vld [vmem:[%s287 + $0x24] sm:$0xf]
    %v298 = vld [vmem:[%s287 + $0x28] sm:$0xf]
    %v299 = vld [vmem:[%s287 + $0x2c] sm:$0xf]
    %v300 = vld [vmem:[%s287 + $0x30] sm:$0xf]
    %v301 = vld [vmem:[%s287 + $0x34] sm:$0xf]
    %v302 = vld [vmem:[%s287 + $0x38] sm:$0xf]
    %v303 = vld [vmem:[%s287 + $0x3c] sm:$0xf]
    %s304 = scalar_lea.vmem [#allocation4], 64
    %v305 = vld [vmem:[%s304] sm:$0xf]
    %v306 = vld [vmem:[%s304 + $0x4] sm:$0xf]
    %v307 = vld [vmem:[%s304 + $0x8] sm:$0xf]
    %v308 = vld [vmem:[%s304 + $0xc] sm:$0xf]
    %v309 = vld [vmem:[%s304 + $0x10] sm:$0xf]
    %v310 = vld [vmem:[%s304 + $0x14] sm:$0xf]
    %v311 = vld [vmem:[%s304 + $0x18] sm:$0xf]
    %v312 = vld [vmem:[%s304 + $0x1c] sm:$0xf]
    %v313 = vld [vmem:[%s304 + $0x20] sm:$0xf]
    %v314 = vld [vmem:[%s304 + $0x24] sm:$0xf]
    %v315 = vld [vmem:[%s304 + $0x28] sm:$0xf]
    %v316 = vld [vmem:[%s304 + $0x2c] sm:$0xf]
    %v317 = vld [vmem:[%s304 + $0x30] sm:$0xf]
    %v318 = vld [vmem:[%s304 + $0x34] sm:$0xf]
    %v319 = vld [vmem:[%s304 + $0x38] sm:$0xf]
    %v320 = vld [vmem:[%s304 + $0x3c] sm:$0xf]
    %v337 = vunpack.c.l.b16 %v305
    %v338 = vunpack.c.l.b16 %v306
    %v339 = vunpack.c.l.b16 %v307
    %v340 = vunpack.c.l.b16 %v308
    %v341 = vunpack.c.l.b16 %v309
    %v342 = vunpack.c.l.b16 %v310
    %v343 = vunpack.c.l.b16 %v311
    %v344 = vunpack.c.l.b16 %v312
    %v345 = vunpack.c.l.b16 %v313
    %v346 = vunpack.c.l.b16 %v314
    %v347 = vunpack.c.l.b16 %v315
    %v348 = vunpack.c.l.b16 %v316
    %v349 = vunpack.c.l.b16 %v317
    %v350 = vunpack.c.l.b16 %v318
    %v351 = vunpack.c.l.b16 %v319
    %v352 = vunpack.c.l.b16 %v320
    %v353 = vpack.c.b16 %v338, %v337
    %v354 = vpack.c.b16 %v340, %v339
    %v355 = vpack.c.b16 %v342, %v341
    %v356 = vpack.c.b16 %v344, %v343
    %v357 = vpack.c.b16 %v346, %v345
    %v358 = vpack.c.b16 %v348, %v347
    %v359 = vpack.c.b16 %v350, %v349
    %v360 = vpack.c.b16 %v352, %v351
    %369 = vmatprep.subr.bf16.mxu0 0
    %370 = vmatpush1.bf16.msra.mxu0 %v360
    %371 = vmatprep.subr.bf16.mxu0 0
    %372 = vmatpush1.bf16.msra.mxu0 %v359
    %373 = vmatprep.subr.bf16.mxu0 0
    %374 = vmatpush1.bf16.msra.mxu0 %v358
    %375 = vmatprep.subr.bf16.mxu0 0
    %376 = vmatpush1.bf16.msra.mxu0 %v357
    %377 = vmatprep.subr.bf16.mxu0 0
    %378 = vmatpush1.bf16.msra.mxu0 %v356
    %379 = vmatprep.subr.bf16.mxu0 0
    %380 = vmatpush1.bf16.msra.mxu0 %v355
    %381 = vmatprep.subr.bf16.mxu0 0
    %382 = vmatpush1.bf16.msra.mxu0 %v354
    %383 = vmatprep.subr.bf16.mxu0 0
    %384 = vmatpush1.bf16.msra.mxu0 %v353
    %385 = vmatprep.subr.bf16.mxu0 0
    %386 = vmatpush2.bf16.msra.mxu0 0
    %387 = vmatprep.subr.bf16.mxu0 0
    %388 = vmatpush2.bf16.msra.mxu0 0
    %389 = vmatprep.subr.bf16.mxu0 0
    %390 = vmatpush2.bf16.msra.mxu0 0
    %391 = vmatprep.subr.bf16.mxu0 0
    %392 = vmatpush2.bf16.msra.mxu0 0
    %393 = vmatprep.subr.bf16.mxu0 0
    %394 = vmatpush2.bf16.msra.mxu0 0
    %395 = vmatprep.subr.bf16.mxu0 0
    %396 = vmatpush2.bf16.msra.mxu0 0
    %397 = vmatprep.subr.bf16.mxu0 0
    %398 = vmatpush2.bf16.msra.mxu0 0
    %399 = vmatprep.subr.bf16.mxu0 0
    %400 = vmatpush2.bf16.msra.mxu0 0
    %401 = vmatprep.mubr.bf16.mxu0 0
    %402 = vmatmul.mubr.bf16.gmra.mxu0 %v93
    %v403 = vpop.f32.mrf.mxu0
    %v404 = vadd.f32 0.0, %v403
    %v405 = vpop.f32.mrf.mxu0
    %v406 = vpop.f32.mrf.mxu0
    %v407 = vadd.f32 0.0, %v406
    %v408 = vpop.f32.mrf.mxu0
    %409 = vdwg.mxu0
    %v426 = vunpack.c.l.b16 %v288
    %v427 = vunpack.c.l.b16 %v289
    %v428 = vunpack.c.l.b16 %v290
    %v429 = vunpack.c.l.b16 %v291
    %v430 = vunpack.c.l.b16 %v292
    %v431 = vunpack.c.l.b16 %v293
    %v432 = vunpack.c.l.b16 %v294
    %v433 = vunpack.c.l.b16 %v295
    %v434 = vunpack.c.l.b16 %v296
    %v435 = vunpack.c.l.b16 %v297
    %v436 = vunpack.c.l.b16 %v298
    %v437 = vunpack.c.l.b16 %v299
    %v438 = vunpack.c.l.b16 %v300
    %v439 = vunpack.c.l.b16 %v301
    %v440 = vunpack.c.l.b16 %v302
    %v441 = vunpack.c.l.b16 %v303
    %v442 = vpack.c.b16 %v427, %v426
    %v443 = vpack.c.b16 %v429, %v428
    %v444 = vpack.c.b16 %v431, %v430
    %v445 = vpack.c.b16 %v433, %v432
    %v446 = vpack.c.b16 %v435, %v434
    %v447 = vpack.c.b16 %v437, %v436
    %v448 = vpack.c.b16 %v439, %v438
    %v449 = vpack.c.b16 %v441, %v440
    %458 = vmatprep.subr.bf16.mxu0 0
    %459 = vmatpush1.bf16.msra.mxu0 %v449
    %460 = vmatprep.subr.bf16.mxu0 0
    %461 = vmatpush1.bf16.msra.mxu0 %v448
    %462 = vmatprep.subr.bf16.mxu0 0
    %463 = vmatpush1.bf16.msra.mxu0 %v447
    %464 = vmatprep.subr.bf16.mxu0 0
    %465 = vmatpush1.bf16.msra.mxu0 %v446
    %466 = vmatprep.subr.bf16.mxu0 0
    %467 = vmatpush1.bf16.msra.mxu0 %v445
    %468 = vmatprep.subr.bf16.mxu0 0
    %469 = vmatpush1.bf16.msra.mxu0 %v444
    %470 = vmatprep.subr.bf16.mxu0 0
    %471 = vmatpush1.bf16.msra.mxu0 %v443
    %472 = vmatprep.subr.bf16.mxu0 0
    %473 = vmatpush1.bf16.msra.mxu0 %v442
    %474 = vmatprep.subr.bf16.mxu0 0
    %475 = vmatpush2.bf16.msra.mxu0 0
    %476 = vmatprep.subr.bf16.mxu0 0
    %477 = vmatpush2.bf16.msra.mxu0 0
    %478 = vmatprep.subr.bf16.mxu0 0
    %479 = vmatpush2.bf16.msra.mxu0 0
    %480 = vmatprep.subr.bf16.mxu0 0
    %481 = vmatpush2.bf16.msra.mxu0 0
    %482 = vmatprep.subr.bf16.mxu0 0
    %483 = vmatpush2.bf16.msra.mxu0 0
    %484 = vmatprep.subr.bf16.mxu0 0
    %485 = vmatpush2.bf16.msra.mxu0 0
    %486 = vmatprep.subr.bf16.mxu0 0
    %487 = vmatpush2.bf16.msra.mxu0 0
    %488 = vmatprep.subr.bf16.mxu0 0
    %489 = vmatpush2.bf16.msra.mxu0 0
    %490 = vmatprep.mubr.bf16.mxu0 0
    %491 = vmatmul.mubr.bf16.gmra.mxu0 %v286
    %v492 = vpop.f32.mrf.mxu0
    %v493 = vadd.f32 %v404, %v492
    %v494 = vpop.f32.mrf.mxu0
    %v495 = vpop.f32.mrf.mxu0
    %v496 = vadd.f32 %v407, %v495
    %v497 = vpop.f32.mrf.mxu0
    %498 = vdwg.mxu0
    %s499 = scalar_lea.vmem %s4, 1
    %v500 = vld [vmem:[%s499] sm:$0x1]
    %v502 = vlaneseq
    %v503 = vshrl.u32 %v502, 7
    %v504 = vsub.s32 0, %v503
    %v505 = vrot.slane %v500, %v504
    %v507 = vadd.f32 %v493, %v505
    %v508 = vadd.f32 %v496, %v505
    %v509 = vtanh.pop %v507
    %v510 = vtanh.pop %v508
    %v511 = vadd.f32 %v284, %v509
    %v512 = vadd.f32 %v285, %v510
    %v513 = vpack.c.bf16 %v512, %v511
    %v515 = vunpack.c.l.b16 %v513
    %v516 = vunpack.c.h.b16 %v513
    %v517 = vpack.c.b16 %v515, %v515
    %v518 = vpack.c.b16 %v516, %v516
    %521 = vst [vmem:[%s5] sm:$0xf] %v517
    %522 = vst [vmem:[%s5 + $0x4] sm:$0xf] %v518
    %v523 = vadd.f32 %v511, %v512
    %v524 = vrot.slane %v523, 4
    %v525 = vadd.f32 %v523, %v524
    %v526 = vrot.slane %v525, 2
    %v527 = vadd.f32 %v525, %v526
    %v528 = vrot.slane %v527, 1
    %v529 = vadd.f32 %v527, %v528
    %v530 = vmul.f32 %v511, %v511
    %v531 = vmul.f32 %v512, %v512
    %v532 = vadd.f32 %v530, %v531
    %v533 = vrot.slane %v532, 4
    %v534 = vadd.f32 %v532, %v533
    %v535 = vrot.slane %v534, 2
    %v536 = vadd.f32 %v534, %v535
    %v537 = vrot.slane %v536, 1
    %v538 = vadd.f32 %v536, %v537
    %539 = vst [vmem:[%s6] sm:$0xff] %v529
    %540 = vst [vmem:[%s7] sm:$0xff] %v538
    // Predicated region
    $region30: #{_decoder_forward.2} parent=1 // pred_check
      _
    $region31: #{_decoder_forward.2} parent=1 // pred_check_branch
      %542 = sbr.rel (0) target = $region33
    $region32: #{_decoder_forward.2} parent=1 // pred_region
      _
    $region33: #{_decoder_forward.2} parent=1 // pred_fallthru
      _
    // Predicated region
    $region34: #{_decoder_forward.2} parent=1 // pred_check
      _
    $region35: #{_decoder_forward.2} parent=1 // pred_check_branch
      %544 = sbr.rel (0) target = $region37
    $region36: #{_decoder_forward.2} parent=1 // pred_region
      _
    $region37: #{_decoder_forward.2} parent=1 // pred_fallthru
      _
    // Predicated region
    $region38: #{_decoder_forward.2} parent=1 // pred_check
      _
    $region39: #{_decoder_forward.2} parent=1 // pred_check_branch
      %546 = sbr.rel (0) target = $region41
    $region40: #{_decoder_forward.2} parent=1 // pred_region
      _
    $region41: #{_decoder_forward.2} parent=1 // pred_fallthru
      _
    // Predicated region
    $region42: #{_decoder_forward.2} parent=1 // pred_check
      _
    $region43: #{_decoder_forward.2} parent=1 // pred_check_branch
      %548 = sbr.rel (0) target = $region45
    $region44: #{_decoder_forward.2} parent=1 // pred_region
      _
    $region45: #{_decoder_forward.2} parent=1 // pred_fallthru
      _
    // Predicated region
    $region46: #{_decoder_forward.2} parent=1 // pred_check
      _
    $region47: #{_decoder_forward.2} parent=1 // pred_check_branch
      %550 = sbr.rel (0) target = $region49
    $region48: #{_decoder_forward.2} parent=1 // pred_region
      _
    $region49: #{_decoder_forward.2} parent=1 // pred_fallthru
      _
    // Predicated region
    $region50: #{_decoder_forward.2} parent=1 // pred_check
      _
    $region51: #{_decoder_forward.2} parent=1 // pred_check_branch
      %552 = sbr.rel (0) target = $region53
    $region52: #{_decoder_forward.2} parent=1 // pred_region
      _
    $region53: #{_decoder_forward.2} parent=1 // pred_fallthru
      _
    %553 = vsyncpa [#allocation3], 1
    %554 = vsyncpa [#allocation5], 1

</llo_original>
